<compile_context>
chip_gen: v7x
topology: tpu7x:2x2x1
jax: 0.10.0
libtpu: 0.0.40
codegen_flags: <defaults>
</compile_context>

<pallas_src>
import functools

import jax
import jax.numpy as jnp
from jax import lax
from jax.experimental import pallas as pl
from jax.experimental.pallas import tpu as pltpu


def _sigmoid_from_logits(s):
    # sigmoid(x) = 0.5*tanh(0.5*x) + 0.5 : a single EUP transcendental (tanh)
    # instead of exp + reciprocal; the mul/adds ride the 4-wide VALU.
    # TODO(synk): bf16 tanh would double EUP throughput on v6e/v7x; kept f32 so
    # v5e (no bf16 EUP) and strict-accuracy users share one code path.
    return 0.5 * jnp.tanh(0.5 * s) + 0.5


def _decoder_kernel_resident(zl_ref, zfull_ref, out_ref, *, tile_n):
    # zl_ref: (tm, D) row tile (pipelined); zfull_ref: (Np, D) whole z resident
    # in VMEM (single copy); out_ref: (tm, tn).
    j = pl.program_id(1)
    start = pl.multiple_of(j * tile_n, tile_n)
    zr = zfull_ref[pl.ds(start, tile_n), :]
    # TODO(synk): if the bundle shows vld/vst spills around this slice, split
    # the contraction over D chunks with a short unrolled fori_loop.
    s = lax.dot_general(
        zl_ref[...],
        zr,
        dimension_numbers=(((1,), (1,)), ((), ())),  # contract last dims, no .T
        preferred_element_type=jnp.float32,
    )
    out_ref[...] = _sigmoid_from_logits(s).astype(out_ref.dtype)


def _decoder_kernel_tiled(zl_ref, zr_ref, out_ref):
    # zr_ref: (tn, D) column panel of z (contracted over D, no transpose).
    s = lax.dot_general(
        zl_ref[...],
        zr_ref[...],
        dimension_numbers=(((1,), (1,)), ((), ())),
        preferred_element_type=jnp.float32,
    )
    out_ref[...] = _sigmoid_from_logits(s).astype(out_ref.dtype)


def _round_up(x, m):
    return ((x + m - 1) // m) * m


def _pick_tile(n, preferred, quantum, min_blocks=1):
    """(8,128)-aligned tile <= preferred; the grid uses pl.cdiv so ragged edge
    blocks are masked by Pallas (no full-N fallback). min_blocks>1 keeps at
    least that many grid steps when possible (v7x megacore sharding)."""
    t = min(_round_up(preferred, quantum), _round_up(n, quantum))
    if min_blocks > 1 and n > quantum:
        t = min(t, _round_up(-(-n // min_blocks), quantum))
    return max(t, quantum)


_VMEM_SLACK = 4 * 1024 * 1024  # headroom for compiler scratch / semaphores


def _vmem_budget_bytes():
    """Per-core VMEM budget derived from the actual generation when possible
    (v5e/v6e: 128 MiB physical, v7x: 64 MiB/TC). The default scoped limits are
    only 16/32 MiB, so vmem_limit_bytes is raised explicitly to this value."""
    cap = 64 * 1024 * 1024  # conservative fallback (v7x per-TC VMEM)
    try:
        cap = int(pltpu.get_tpu_info().vmem_capacity_bytes)
    except Exception:
        pass
    return max(
        2 * _VMEM_SLACK,
        min(cap * 3 // 4, cap - 16 * 1024 * 1024, 96 * 1024 * 1024),
    )


@functools.partial(
    jax.jit,
    static_argnames=("tile_m", "tile_n", "matmul_dtype", "out_dtype", "force_tiled"),
)
def inner_product_decoder(z, *, tile_m=512, tile_n=1024,
                          matmul_dtype=jnp.bfloat16, out_dtype=None,
                          force_tiled=False):
    """adj = sigmoid(z @ z.T); z: (N, D).

    out_dtype: storage dtype of the adjacency (default: z.dtype). The kernel is
      HBM output-store bound for realistic D, so out_dtype=jnp.bfloat16 halves
      HBM write traffic (~1.7-2x wall clock at large N).
    matmul_dtype: MXU input dtype (accumulation is always f32); pass
      jnp.float32 for strict parity with the f32 PyTorch reference.
    """
    N, D = z.shape
    out_dt = jnp.dtype(z.dtype) if out_dtype is None else jnp.dtype(out_dtype)
    mm_dt = jnp.dtype(matmul_dtype)
    out_isz, mm_isz = out_dt.itemsize, mm_dt.itemsize

    # Tile selection: cdiv grid with masked ragged edges; rows get >= 2 blocks
    # for small N so v7x's 2 TensorCores both have work.
    tm = _pick_tile(N, tile_m, 8, min_blocks=2)     # sublane-dim tile
    tn = _pick_tile(N, tile_n, 128, min_blocks=1)   # lane-dim tile (output last dim)

    budget = _vmem_budget_bytes()
    z_mm = z.astype(mm_dt)  # bf16 MXU inputs; f32 accumulation in-kernel

    grid_j = pl.cdiv(N, tn)
    n_pad = grid_j * tn
    resident_bytes = n_pad * D * mm_isz             # single VMEM copy (not double-buffered)
    resident_total = (resident_bytes + 2 * tm * D * mm_isz
                      + 2 * tm * tn * out_isz + _VMEM_SLACK)
    use_resident = (not force_tiled) and resident_total <= budget

    if use_resident:
        grid_i = pl.cdiv(N, tm)
        # Pad the resident copy's rows so the in-kernel pl.ds column slice never
        # reads out of bounds on a ragged last panel (the padded rows land in
        # output columns >= N, which the masked edge store discards).
        z_rhs = z_mm if n_pad == N else jnp.pad(z_mm, ((0, n_pad - N), (0, 0)))
        kernel = functools.partial(_decoder_kernel_resident, tile_n=tn)
        grid = (grid_i, grid_j)                       # i outer, j inner:
        in_specs = [                                  # LHS row tile fetched once per i
            pl.BlockSpec((tm, D), lambda i, j: (i, 0)),
            # Whole z lives in VMEM for the kernel's lifetime: one copy, no
            # double-buffering, zero redundant HBM re-reads of the RHS.
            pl.BlockSpec(memory_space=pltpu.MemorySpace.VMEM),
        ]
        out_specs = pl.BlockSpec((tm, tn), lambda i, j: (i, j))
    else:
        # Shrink tiles if the streamed buffers would blow the VMEM budget.
        def _tiled_total(tm_, tn_):
            return (2 * tm_ * D * mm_isz + 2 * tn_ * D * mm_isz
                    + 2 * tm_ * tn_ * out_isz + _VMEM_SLACK)

        while _tiled_total(tm, tn) > budget and (tm > 8 or tn > 128):
            if tn > 128 and (tn >= tm or tm <= 8):
                tn = max(128, _round_up(tn // 2, 128))
            else:
                tm = max(8, _round_up(tm // 2, 8))
        grid_i = pl.cdiv(N, tm)
        grid_j = pl.cdiv(N, tn)
        z_rhs = z_mm
        kernel = _decoder_kernel_tiled
        grid = (grid_j, grid_i)                       # j outer, i inner: the big
        in_specs = [                                  # (tn, D) RHS panel is reused
            pl.BlockSpec((tm, D), lambda j, i: (i, 0)),   # across the inner loop ->
            pl.BlockSpec((tn, D), lambda j, i: (j, 0)),   # z re-read factor N/tn (was N/tm)
        ]
        out_specs = pl.BlockSpec((tm, tn), lambda j, i: (i, j))

    return pl.pallas_call(
        kernel,
        out_shape=jax.ShapeDtypeStruct((N, N), out_dt),
        grid_spec=pltpu.PrefetchScalarGridSpec(
            num_scalar_prefetch=0,
            grid=grid,
            in_specs=in_specs,
            out_specs=out_specs,
        ),
        compiler_params=pltpu.CompilerParams(
            dimension_semantics=("parallel", "parallel"),
            vmem_limit_bytes=int(budget),
        ),
    )(z_mm, z_rhs)


class InnerProductDecoder:
    """JAX/Pallas port of the PyTorch InnerProductDecoder (fused sigmoid)."""

    def __init__(self, dropout, act=None):
        self.dropout = float(dropout)
        if act is not None and act is not jax.nn.sigmoid:
            # TODO(synk): only the fused sigmoid activation is supported.
            raise NotImplementedError("InnerProductDecoder kernel fuses sigmoid only")
        self.act = jax.nn.sigmoid
        self.training = False  # eval mode by default (matches typical module use)

    def __call__(self, z, *, rng=None, out_dtype=None):
        if self.training and self.dropout > 0.0:
            # Dropout is applied to z ONCE (outside the kernel), so the same
            # mask feeds both sides of z @ z.T — matching F.dropout(z) in the spec.
            # TODO(synk): fuse dropout in-kernel with pltpu.prng_* (needs
            # row-consistent masks across LHS/RHS tiles).
            if rng is None:
                raise ValueError("rng key required for training-mode dropout")
            keep = 1.0 - self.dropout
            mask = jax.random.bernoulli(rng, keep, z.shape)
            z = jnp.where(mask, z / keep, 0.0).astype(z.dtype)
        return inner_product_decoder(z, out_dtype=out_dtype)


if __name__ == "__main__":
    key = jax.random.PRNGKey(0)
    # Small latent embedding: N=256 nodes, D=128 latent dims (TPU-tile friendly).
    N, D = 256, 128
    z = jax.random.normal(key, (N, D), dtype=jnp.float32)

    decoder = InnerProductDecoder(dropout=0.1)  # eval mode -> dropout is identity
    adj = jax.block_until_ready(decoder(z))
    assert adj.shape == (N, N) and adj.dtype == jnp.float32

    # Reference with the same bf16-input / f32-accumulate contraction (tight
    # check of the kernel math itself).
    z_bf = z.astype(jnp.bfloat16)
    ref_bf = jax.nn.sigmoid(
        lax.dot_general(z_bf, z_bf, (((1,), (1,)), ((), ())),
                        preferred_element_type=jnp.float32))
    err_bf = float(jnp.max(jnp.abs(adj - ref_bf)))
    assert err_bf < 5e-3, f"resident kernel vs bf16 reference max err {err_bf}"

    # Full-precision reference (looser tolerance: bf16 MXU inputs).
    ref_f32 = jax.nn.sigmoid(z @ z.T)
    err_f32 = float(jnp.max(jnp.abs(adj - ref_f32)))
    assert err_f32 < 5e-2, f"kernel vs f32 reference max err {err_f32}"

    # Streamed (non-resident) path: exercises the swapped-grid tiling.
    adj_t = jax.block_until_ready(inner_product_decoder(z, force_tiled=True))
    err_t = float(jnp.max(jnp.abs(adj_t - ref_bf)))
    assert err_t < 5e-3, f"tiled kernel vs bf16 reference max err {err_t}"

    # bf16 output stores (halves HBM write traffic for large N).
    adj_b = jax.block_until_ready(inner_product_decoder(z, out_dtype=jnp.bfloat16))
    assert adj_b.dtype == jnp.bfloat16
    err_b = float(jnp.max(jnp.abs(adj_b.astype(jnp.float32) - ref_f32)))
    assert err_b < 1e-1, f"bf16-output kernel vs f32 reference max err {err_b}"

    print("KERNEL_OK")
</pallas_src>

<mosaic_0001>
module attributes {stable_mosaic.version = 11 : i64} {
  func.func @_decoder_kernel_resident(%arg0: i32, %arg1: i32, %arg2: memref<128x128xbf16, #tpu.memory_space<vmem>>, %arg3: memref<256x128xbf16, #tpu.memory_space<vmem>>, %arg4: memref<128x256xf32, #tpu.memory_space<vmem>>) attributes {dimension_semantics = [#tpu.dimension_semantics<parallel>, #tpu.dimension_semantics<parallel>], iteration_bounds = array<i64: 2, 1>, scalar_prefetch = 0 : i64, scratch_operands = 0 : i64, tpu.core_type = #tpu.core_type<tc>, window_params = [{transform_indices = @transform_0, window_bounds = array<i64: 128, 128>}, {pipeline_mode = #tpu.pipeline_mode<synchronous>, transform_indices = @transform_1, window_bounds = array<i64: 256, 128>}, {transform_indices = @transform_2, window_bounds = array<i64: 128, 256>}]} {
    %c256_i32 = arith.constant 256 : i32
    %0 = arith.muli %arg1, %c256_i32 : i32
    %1 = tpu.assume_multiple %0, 256 : i32
    %2 = arith.index_cast %1 : i32 to index
    %c0 = arith.constant 0 : index
    %3 = vector.load %arg3[%2, %c0] : memref<256x128xbf16, #tpu.memory_space<vmem>>, vector<256x128xbf16>
    %c0_0 = arith.constant 0 : index
    %c0_1 = arith.constant 0 : index
    %4 = vector.load %arg2[%c0_0, %c0_1] : memref<128x128xbf16, #tpu.memory_space<vmem>>, vector<128x128xbf16>
    %cst = arith.constant dense<0.000000e+00> : vector<128x256xf32>
    %5 = tpu.matmul %4, %3, %cst {dimension_numbers = #tpu.dot_dimension_numbers<[1], [1], [0], [0], [0, 0, 1, 0], [], []>} : vector<128x128xbf16>, vector<256x128xbf16>, vector<128x256xf32> -> vector<128x256xf32>
    %cst_2 = arith.constant 5.000000e-01 : f32
    %6 = vector.broadcast %cst_2 : f32 to vector<128x256xf32>
    %7 = arith.mulf %6, %5 : vector<128x256xf32>
    %8 = math.tanh %7 : vector<128x256xf32>
    %cst_3 = arith.constant 5.000000e-01 : f32
    %9 = vector.broadcast %cst_3 : f32 to vector<128x256xf32>
    %10 = arith.mulf %9, %8 : vector<128x256xf32>
    %cst_4 = arith.constant 5.000000e-01 : f32
    %11 = vector.broadcast %cst_4 : f32 to vector<128x256xf32>
    %12 = arith.addf %10, %11 : vector<128x256xf32>
    %c0_5 = arith.constant 0 : index
    %c0_6 = arith.constant 0 : index
    %13 = vector.load %arg4[%c0_5, %c0_6] : memref<128x256xf32, #tpu.memory_space<vmem>>, vector<128x256xf32>
    tpu.vector_store %arg4[%c0_5, %c0_6], %12 {strides = array<i32>} : memref<128x256xf32, #tpu.memory_space<vmem>>, vector<128x256xf32>,
    return
  }
  func.func @transform_0(%arg0: i32, %arg1: i32) -> (i32, i32) {
    %c0_i32 = arith.constant 0 : i32
    %c0_i32_0 = arith.constant 0 : i32
    return %arg0, %c0_i32 : i32, i32
  }
  func.func @transform_1(%arg0: i32, %arg1: i32) -> (i32, i32) {
    %c0_i32 = arith.constant 0 : i32
    %c0_i32_0 = arith.constant 0 : i32
    %c0_i32_1 = arith.constant 0 : i32
    return %c0_i32, %c0_i32_0 : i32, i32
  }
  func.func @transform_2(%arg0: i32, %arg1: i32) -> (i32, i32) {
    %c0_i32 = arith.constant 0 : i32
    return %arg0, %arg1 : i32, i32
  }
}

</mosaic_0001>

<llo_original>
// kernel: inner_product_decoder.1
$region0: #{inner_product_decoder.1}
  #allocation0 [shape = 'u32[]', space=smem, size = 0x4, offset = 0x4, fixed_abs, tag = 'smem constant byte address 0x4 - core index']
  #allocation1 [shape = 'u32[144,128]{1,0:T(1,128)}', space=vmem, size = 0x12000, scoped, tag = 'internal scratch']
  %s0 = inlined_call_operand.vmem [shape: bf16[256,128], index: 0, kind: input, shape index: {}, may-alias: {0,1}]
  %s1 = inlined_call_operand.vmem [shape: bf16[256,128], index: 1, kind: input, shape index: {}, may-alias: {0,1}]
  %s2 = inlined_call_operand.hbm [shape: f32[256,256], index: 2, kind: output, shape index: {}]
  %s3 = sld [smem:[#allocation0]]
  $region41: #{inner_product_decoder.1} parent=0
    _
  %s5 = ssub.s32 1, %s3
  %s6 = scalar_select 0, %s5, %s3
  $region1: #{inner_product_decoder.1} parent=0
    #allocation2 [shape = 'u8[262144]{0}', space=vmem, size = 0x40000, scoped, tag = 'output window, operand 0']
    #allocation3 [shape = 's32[2]{0}', space=sflag, size = 0x8, scoped, tag = 'scoped memory for inner_product_decoder.1']
    %7 = vsyncpa [#allocation3], 0
    %s8 = scalar_lea.sflag [#allocation3], 1
    %9 = vsyncpa %s8, 0
    loop: start=0, step=1, limit=4
    $region2: #{inner_product_decoder.1} parent=1 // loop_pre_header
      _
    $region3: #{inner_product_decoder.1} parent=1 // loop_header
      %s11 = sphi 0, %s15
      %p12 = scmp.ge.s32.totalorder %s11, 4
      %s18 = sphi 0, %s30
      %s19 = sphi 0, %s26
      %s20 = sphi 0, %s18
      %s21 = sphi 0, %s19
      %s22 = sphi 0, %s20
      %s23 = sphi 0, %s21
      %s33 = sphi 0, %s35
      %s36 = sphi 0, %s33
      %s37 = sphi 0, %s36
      %s53 = sphi 0, %s37
      %s57 = sphi 0, %s57
      %s59 = sphi 0, %s57
      %s60 = sphi 0, %s59
      %s74 = sphi 0, %s60
      %s82 = sphi 0, %s84
      %s85 = sphi 0, %s82
      %s86 = sphi 0, %s85
      %s102 = sphi 0, %s86
    $region4: #{inner_product_decoder.1} parent=1 // loop_header_branch
      %14 = sbr.rel (%p12) target = $region8
    $region5: #{inner_product_decoder.1} parent=1 // loop_body
      %s16 = ssub.s32 %s11, 1
      %s17 = ssub.s32 %s11, 2
      %s24 = sadd.s32 1, %s19
      %p25 = scmp.ge.s32.totalorder %s24, 1
      %s26 = scalar_select %p25, 0, %s24
      %s27 = sadd.s32 1, %s18
      %s28 = scalar_select %p25, %s27, %s18
      %p29 = scmp.ge.s32.totalorder %s28, 2
      %s30 = scalar_select %p29, 0, %s28
      %s31 = ssub.s32 %s18, %s30
      %p32 = scmp.eq.s32.totalorder %s31, 0
      %s34 = sadd.s32 %s33, 1
      %s35 = scalar_select %p32, %s33, %s34
      %p38 = pneg %p32
      %p39 = scmp.eq.s32.totalorder %s11, 1
      %p40 = por %p38, %p39
      %p41 = scmp.ne.s32.totalorder %s33, %s36
      %p42 = scmp.eq.s32.totalorder %s11, 0
      %p43 = por %p41, %p42
      %p44 = scmp.ne.s32.totalorder %s33, %s36
      %p45 = scmp.eq.s32.totalorder %s16, 1
      %p46 = por %p44, %p45
      %p47 = scmp.ne.s32.totalorder %s36, %s37
      %p48 = scmp.eq.s32.totalorder %s16, 0
      %p49 = por %p47, %p48
      %p50 = scmp.ne.s32.totalorder %s36, %s37
      %p51 = scmp.eq.s32.totalorder %s17, 1
      %p52 = por %p50, %p51
      %p54 = scmp.ne.s32.totalorder %s37, %s53
      %p55 = scmp.eq.s32.totalorder %s17, 0
      %p56 = por %p54, %p55
      %s58 = sadd.s32 %s57, 1
      %p61 = scmp.eq.s32.totalorder %s11, 1
      %p62 = scmp.ne.s32.totalorder %s57, %s59
      %p63 = scmp.eq.s32.totalorder %s11, 0
      %p64 = por %p62, %p63
      %p65 = scmp.ne.s32.totalorder %s57, %s59
      %p66 = scmp.eq.s32.totalorder %s16, 1
      %p67 = por %p65, %p66
      %p68 = scmp.ne.s32.totalorder %s59, %s60
      %p69 = scmp.eq.s32.totalorder %s16, 0
      %p70 = por %p68, %p69
      %p71 = scmp.ne.s32.totalorder %s59, %s60
      %p72 = scmp.eq.s32.totalorder %s17, 1
      %p73 = por %p71, %p72
      %p75 = scmp.ne.s32.totalorder %s60, %s74
      %p76 = scmp.eq.s32.totalorder %s17, 0
      %p77 = por %p75, %p76
      %s78 = ssub.s32 %s18, %s30
      %s79 = ssub.s32 %s19, %s26
      %s80 = sor.u32 %s78, %s79
      %p81 = scmp.eq.s32.totalorder %s80, 0
      %s83 = sadd.s32 %s82, 1
      %s84 = scalar_select %p81, %s82, %s83
      %p87 = pneg %p81
      %p88 = scmp.eq.s32.totalorder %s11, 1
      %p89 = por %p87, %p88
      %p90 = scmp.ne.s32.totalorder %s82, %s85
      %p91 = scmp.eq.s32.totalorder %s11, 0
      %p92 = por %p90, %p91
      %p93 = scmp.ne.s32.totalorder %s82, %s85
      %p94 = scmp.eq.s32.totalorder %s16, 1
      %p95 = por %p93, %p94
      %p96 = scmp.ne.s32.totalorder %s85, %s86
      %p97 = scmp.eq.s32.totalorder %s16, 0
      %p98 = por %p96, %p97
      %p99 = scmp.ne.s32.totalorder %s85, %s86
      %p100 = scmp.eq.s32.totalorder %s17, 1
      %p101 = por %p99, %p100
      %p103 = scmp.ne.s32.totalorder %s86, %s102
      %p104 = scmp.eq.s32.totalorder %s17, 0
      %p105 = por %p103, %p104
      %p106 = scmp.le.s32.totalorder 1, %s11
      %p107 = scmp.lt.s32.totalorder %s11, 3
      %p108 = pnand %p106, %p107
      %p109 = pneg %p108
      // Predicated region
      $region9: #{inner_product_decoder.1} parent=5 // pred_check
        _
      $region10: #{inner_product_decoder.1} parent=5 // pred_check_branch
        %111 = sbr.rel (%p108) target = $region12
      $region11: #{inner_product_decoder.1} parent=5 // pred_region
        %s112 = ssub.s32 %s11, 1
        // Predicated region
        $region13: #{inner_product_decoder.1} parent=11 // pred_check
          %p113 = pneg %p70
        $region14: #{inner_product_decoder.1} parent=11 // pred_check_branch
          %115 = sbr.rel (%p113) target = $region16
        $region15: #{inner_product_decoder.1} parent=11 // pred_region
          _
        $region16: #{inner_product_decoder.1} parent=11 // pred_fallthru
          _
      $region12: #{inner_product_decoder.1} parent=5 // pred_fallthru
        _
      %p116 = scmp.lt.s32.totalorder %s11, 2
      // Predicated region
      $region17: #{inner_product_decoder.1} parent=5 // pred_check
        %p117 = pneg %p116
      $region18: #{inner_product_decoder.1} parent=5 // pred_check_branch
        %119 = sbr.rel (%p117) target = $region20
      $region19: #{inner_product_decoder.1} parent=5 // pred_region
        // Predicated region
        $region21: #{inner_product_decoder.1} parent=19 // pred_check
          %p120 = pneg %p43
        $region22: #{inner_product_decoder.1} parent=19 // pred_check_branch
          %122 = sbr.rel (%p120) target = $region24
        $region23: #{inner_product_decoder.1} parent=19 // pred_region
          %s123 = smul.u32 16, %s18
          %p124 = scmp.lt.s32.totalorder %s123, 31
          %s125 = scalar_select %p124, %s123, 31
          %s126 = smul.addr %s125, 4
          %s127 = scalar_lea.vmem %s0, %s126
          %s128 = smul.u32 16, %s18
        $region24: #{inner_product_decoder.1} parent=19 // pred_fallthru
          _
      $region20: #{inner_product_decoder.1} parent=5 // pred_fallthru
        _
      %p129 = scmp.le.s32.totalorder 1, %s11
      %p130 = scmp.lt.s32.totalorder %s11, 3
      %p131 = pnand %p129, %p130
      %p132 = pneg %p131
      // Predicated region
      $region25: #{inner_product_decoder.1} parent=5 // pred_check
        _
      $region26: #{inner_product_decoder.1} parent=5 // pred_check_branch
        %134 = sbr.rel (%p131) target = $region28
      $region27: #{inner_product_decoder.1} parent=5 // pred_region
        %s135 = ssub.s32 %s11, 1
        %s136 = smul.u32 16, %s20
        %p137 = scmp.lt.s32.totalorder %s136, 31
        %s138 = scalar_select %p137, %s136, 31
        %s139 = smul.addr %s138, 4
        %s140 = scalar_lea.vmem %s0, %s139
        %p141 = pneg %p49
        %p142 = pneg %p46
        %p143 = pneg %p70
        %p144 = pneg %p67
        %p145 = pneg %p98
        %p146 = pneg %p95
        %s147 = sand.u32 %s85, 1
        %s148 = scalar_lea.sflag [#allocation3], %s147
        %s149 = sand.u32 %s85, 1
        %s150 = smul.addr %s149, 256
        %s151 = scalar_lea.vmem [#allocation2], %s150
        %s152 = smul.u32 16, %s20
        %p153 = scmp.lt.s32.totalorder %s152, 31
        %s154 = scalar_select %p153, %s152, 31
        %s155 = smul.addr %s154, 4
        %s156 = scalar_lea.vmem %s0, %s155
        %s157 = smul.u32 16, %s20
        %s158 = smul.u32 16, %s20
        %s159 = smul.u32 2, %s21
        %s161 = smul.u32 %s21, 256
        %s162 = sshra.s32 %s161, 3
        %s163 = sand.u32 %s161, 7
        %s164 = smul.addr %s162, 4
        %s165 = scalar_lea.vmem %s1, %s164
        %v166 = vld [vmem:[%s165] sm:$0xf]
        %v167 = vld [vmem:[%s165 + $0x4] sm:$0xf]
        %v168 = vld [vmem:[%s165 + $0x8] sm:$0xf]
        %v169 = vld [vmem:[%s165 + $0xc] sm:$0xf]
        %v170 = vld [vmem:[%s165 + $0x10] sm:$0xf]
        %v171 = vld [vmem:[%s165 + $0x14] sm:$0xf]
        %v172 = vld [vmem:[%s165 + $0x18] sm:$0xf]
        %v173 = vld [vmem:[%s165 + $0x1c] sm:$0xf]
        %v174 = vld [vmem:[%s165 + $0x20] sm:$0xf]
        %v175 = vld [vmem:[%s165 + $0x24] sm:$0xf]
        %v176 = vld [vmem:[%s165 + $0x28] sm:$0xf]
        %v177 = vld [vmem:[%s165 + $0x2c] sm:$0xf]
        %v178 = vld [vmem:[%s165 + $0x30] sm:$0xf]
        %v179 = vld [vmem:[%s165 + $0x34] sm:$0xf]
        %v180 = vld [vmem:[%s165 + $0x38] sm:$0xf]
        %v181 = vld [vmem:[%s165 + $0x3c] sm:$0xf]
        %v182 = vld [vmem:[%s165 + $0x40] sm:$0xf]
        %v183 = vld [vmem:[%s165 + $0x44] sm:$0xf]
        %v184 = vld [vmem:[%s165 + $0x48] sm:$0xf]
        %v185 = vld [vmem:[%s165 + $0x4c] sm:$0xf]
        %v186 = vld [vmem:[%s165 + $0x50] sm:$0xf]
        %v187 = vld [vmem:[%s165 + $0x54] sm:$0xf]
        %v188 = vld [vmem:[%s165 + $0x58] sm:$0xf]
        %v189 = vld [vmem:[%s165 + $0x5c] sm:$0xf]
        %v190 = vld [vmem:[%s165 + $0x60] sm:$0xf]
        %v191 = vld [vmem:[%s165 + $0x64] sm:$0xf]
        %v192 = vld [vmem:[%s165 + $0x68] sm:$0xf]
        %v193 = vld [vmem:[%s165 + $0x6c] sm:$0xf]
        %v194 = vld [vmem:[%s165 + $0x70] sm:$0xf]
        %v195 = vld [vmem:[%s165 + $0x74] sm:$0xf]
        %v196 = vld [vmem:[%s165 + $0x78] sm:$0xf]
        %v197 = vld [vmem:[%s165 + $0x7c] sm:$0xf]
        %v198 = vld [vmem:[%s156] sm:$0xf]
        %v199 = vld [vmem:[%s156 + $0x4] sm:$0xf]
        %v200 = vld [vmem:[%s156 + $0x8] sm:$0xf]
        %v201 = vld [vmem:[%s156 + $0xc] sm:$0xf]
        %v202 = vld [vmem:[%s156 + $0x10] sm:$0xf]
        %v203 = vld [vmem:[%s156 + $0x14] sm:$0xf]
        %v204 = vld [vmem:[%s156 + $0x18] sm:$0xf]
        %v205 = vld [vmem:[%s156 + $0x1c] sm:$0xf]
        %v206 = vld [vmem:[%s156 + $0x20] sm:$0xf]
        %v207 = vld [vmem:[%s156 + $0x24] sm:$0xf]
        %v208 = vld [vmem:[%s156 + $0x28] sm:$0xf]
        %v209 = vld [vmem:[%s156 + $0x2c] sm:$0xf]
        %v210 = vld [vmem:[%s156 + $0x30] sm:$0xf]
        %v211 = vld [vmem:[%s156 + $0x34] sm:$0xf]
        %v212 = vld [vmem:[%s156 + $0x38] sm:$0xf]
        %v213 = vld [vmem:[%s156 + $0x3c] sm:$0xf]
        %v230 = vunpack.c.l.b16 %v198
        %v231 = vunpack.c.l.b16 %v199
        %v232 = vunpack.c.l.b16 %v200
        %v233 = vunpack.c.l.b16 %v201
        %v234 = vunpack.c.l.b16 %v202
        %v235 = vunpack.c.l.b16 %v203
        %v236 = vunpack.c.l.b16 %v204
        %v237 = vunpack.c.l.b16 %v205
        %v238 = vunpack.c.l.b16 %v206
        %v239 = vunpack.c.l.b16 %v207
        %v240 = vunpack.c.l.b16 %v208
        %v241 = vunpack.c.l.b16 %v209
        %v242 = vunpack.c.l.b16 %v210
        %v243 = vunpack.c.l.b16 %v211
        %v244 = vunpack.c.l.b16 %v212
        %v245 = vunpack.c.l.b16 %v213
        %v246 = vpack.c.b16 %v231, %v230
        %v247 = vpack.c.b16 %v233, %v232
        %v248 = vpack.c.b16 %v235, %v234
        %v249 = vpack.c.b16 %v237, %v236
        %v250 = vpack.c.b16 %v239, %v238
        %v251 = vpack.c.b16 %v241, %v240
        %v252 = vpack.c.b16 %v243, %v242
        %v253 = vpack.c.b16 %v245, %v244
        %v294 = vunpack.c.l.b16 %v166
        %v295 = vunpack.c.l.b16 %v167
        %v296 = vunpack.c.l.b16 %v168
        %v297 = vunpack.c.l.b16 %v169
        %v298 = vunpack.c.l.b16 %v170
        %v299 = vunpack.c.l.b16 %v171
        %v300 = vunpack.c.l.b16 %v172
        %v301 = vunpack.c.l.b16 %v173
        %v302 = vunpack.c.l.b16 %v174
        %v303 = vunpack.c.l.b16 %v175
        %v304 = vunpack.c.l.b16 %v176
        %v305 = vunpack.c.l.b16 %v177
        %v306 = vunpack.c.l.b16 %v178
        %v307 = vunpack.c.l.b16 %v179
        %v308 = vunpack.c.l.b16 %v180
        %v309 = vunpack.c.l.b16 %v181
        %v310 = vunpack.c.l.b16 %v182
        %v311 = vunpack.c.l.b16 %v183
        %v312 = vunpack.c.l.b16 %v184
        %v313 = vunpack.c.l.b16 %v185
        %v314 = vunpack.c.l.b16 %v186
        %v315 = vunpack.c.l.b16 %v187
        %v316 = vunpack.c.l.b16 %v188
        %v317 = vunpack.c.l.b16 %v189
        %v318 = vunpack.c.l.b16 %v190
        %v319 = vunpack.c.l.b16 %v191
        %v320 = vunpack.c.l.b16 %v192
        %v321 = vunpack.c.l.b16 %v193
        %v322 = vunpack.c.l.b16 %v194
        %v323 = vunpack.c.l.b16 %v195
        %v324 = vunpack.c.l.b16 %v196
        %v325 = vunpack.c.l.b16 %v197
        %v326 = vpack.c.b16 %v295, %v294
        %v327 = vpack.c.b16 %v297, %v296
        %v328 = vpack.c.b16 %v299, %v298
        %v329 = vpack.c.b16 %v301, %v300
        %v330 = vpack.c.b16 %v303, %v302
        %v331 = vpack.c.b16 %v305, %v304
        %v332 = vpack.c.b16 %v307, %v306
        %v333 = vpack.c.b16 %v309, %v308
        %v334 = vpack.c.b16 %v311, %v310
        %v335 = vpack.c.b16 %v313, %v312
        %v336 = vpack.c.b16 %v315, %v314
        %v337 = vpack.c.b16 %v317, %v316
        %v338 = vpack.c.b16 %v319, %v318
        %v339 = vpack.c.b16 %v321, %v320
        %v340 = vpack.c.b16 %v323, %v322
        %v341 = vpack.c.b16 %v325, %v324
        %358 = vmatprep.subr.bf16.mxu0 0
        %359 = vmatpush1.bf16.xpose.msra.mxu0 %v326
        %360 = vmatprep.subr.bf16.mxu0 0
        %361 = vmatpush1.bf16.xpose.msra.mxu0 %v327
        %362 = vmatprep.subr.bf16.mxu0 0
        %363 = vmatpush1.bf16.xpose.msra.mxu0 %v328
        %364 = vmatprep.subr.bf16.mxu0 0
        %365 = vmatpush1.bf16.xpose.msra.mxu0 %v329
        %366 = vmatprep.subr.bf16.mxu0 0
        %367 = vmatpush1.bf16.xpose.msra.mxu0 %v330
        %368 = vmatprep.subr.bf16.mxu0 0
        %369 = vmatpush1.bf16.xpose.msra.mxu0 %v331
        %370 = vmatprep.subr.bf16.mxu0 0
        %371 = vmatpush1.bf16.xpose.msra.mxu0 %v332
        %372 = vmatprep.subr.bf16.mxu0 0
        %373 = vmatpush1.bf16.xpose.msra.mxu0 %v333
        %374 = vmatprep.subr.bf16.mxu0 0
        %375 = vmatpush1.bf16.xpose.msra.mxu0 %v334
        %376 = vmatprep.subr.bf16.mxu0 0
        %377 = vmatpush1.bf16.xpose.msra.mxu0 %v335
        %378 = vmatprep.subr.bf16.mxu0 0
        %379 = vmatpush1.bf16.xpose.msra.mxu0 %v336
        %380 = vmatprep.subr.bf16.mxu0 0
        %381 = vmatpush1.bf16.xpose.msra.mxu0 %v337
        %382 = vmatprep.subr.bf16.mxu0 0
        %383 = vmatpush1.bf16.xpose.msra.mxu0 %v338
        %384 = vmatprep.subr.bf16.mxu0 0
        %385 = vmatpush1.bf16.xpose.msra.mxu0 %v339
        %386 = vmatprep.subr.bf16.mxu0 0
        %387 = vmatpush1.bf16.xpose.msra.mxu0 %v340
        %388 = vmatprep.subr.bf16.mxu0 0
        %389 = vmatpush1.bf16.xpose.msra.mxu0 %v341
        %390 = vmatprep.mubr.bf16.mxu0 0
        %391 = vmatmul.mubr.bf16.gmra.mrb[0].mxu0 %v246
        %v392 = vpop.f32.mrb[0].mxu0
        %v393 = vadd.f32 0.0, %v392
        %v394 = vpop.f32.mrb[0].mxu0
        %v395 = vadd.f32 0.0, %v394
        %v396 = vpop.f32.mrb[0].mxu0
        %v397 = vadd.f32 0.0, %v396
        %v398 = vpop.f32.mrb[0].mxu0
        %v399 = vadd.f32 0.0, %v398
        %400 = vmatprep.mubr.bf16.mxu0 0
        %401 = vmatmul.mubr.bf16.gmra.mrb[0].mxu0 %v247
        %v402 = vpop.f32.mrb[0].mxu0
        %v403 = vadd.f32 0.0, %v402
        %v404 = vpop.f32.mrb[0].mxu0
        %v405 = vadd.f32 0.0, %v404
        %v406 = vpop.f32.mrb[0].mxu0
        %v407 = vadd.f32 0.0, %v406
        %v408 = vpop.f32.mrb[0].mxu0
        %v409 = vadd.f32 0.0, %v408
        %410 = vmatprep.mubr.bf16.mxu0 0
        %411 = vmatmul.mubr.bf16.gmra.mrb[0].mxu0 %v248
        %v412 = vpop.f32.mrb[0].mxu0
        %v413 = vadd.f32 0.0, %v412
        %v414 = vpop.f32.mrb[0].mxu0
        %v415 = vadd.f32 0.0, %v414
        %v416 = vpop.f32.mrb[0].mxu0
        %v417 = vadd.f32 0.0, %v416
        %v418 = vpop.f32.mrb[0].mxu0
        %v419 = vadd.f32 0.0, %v418
        %420 = vmatprep.mubr.bf16.mxu0 0
        %421 = vmatmul.mubr.bf16.gmra.mrb[0].mxu0 %v249
        %v422 = vpop.f32.mrb[0].mxu0
        %v423 = vadd.f32 0.0, %v422
        %v424 = vpop.f32.mrb[0].mxu0
        %v425 = vadd.f32 0.0, %v424
        %v426 = vpop.f32.mrb[0].mxu0
        %v427 = vadd.f32 0.0, %v426
        %v428 = vpop.f32.mrb[0].mxu0
        %v429 = vadd.f32 0.0, %v428
        %430 = vmatprep.mubr.bf16.mxu0 0
        %431 = vmatmul.mubr.bf16.gmra.mrb[0].mxu0 %v250
        %v432 = vpop.f32.mrb[0].mxu0
        %v433 = vadd.f32 0.0, %v432
        %v434 = vpop.f32.mrb[0].mxu0
        %v435 = vadd.f32 0.0, %v434
        %v436 = vpop.f32.mrb[0].mxu0
        %v437 = vadd.f32 0.0, %v436
        %v438 = vpop.f32.mrb[0].mxu0
        %v439 = vadd.f32 0.0, %v438
        %440 = vmatprep.mubr.bf16.mxu0 0
        %441 = vmatmul.mubr.bf16.gmra.mrb[0].mxu0 %v251
        %v442 = vpop.f32.mrb[0].mxu0
        %v443 = vadd.f32 0.0, %v442
        %v444 = vpop.f32.mrb[0].mxu0
        %v445 = vadd.f32 0.0, %v444
        %v446 = vpop.f32.mrb[0].mxu0
        %v447 = vadd.f32 0.0, %v446
        %v448 = vpop.f32.mrb[0].mxu0
        %v449 = vadd.f32 0.0, %v448
        %450 = vmatprep.mubr.bf16.mxu0 0
        %451 = vmatmul.mubr.bf16.gmra.mrb[0].mxu0 %v252
        %v452 = vpop.f32.mrb[0].mxu0
        %v453 = vadd.f32 0.0, %v452
        %v454 = vpop.f32.mrb[0].mxu0
        %v455 = vadd.f32 0.0, %v454
        %v456 = vpop.f32.mrb[0].mxu0
        %v457 = vadd.f32 0.0, %v456
        %v458 = vpop.f32.mrb[0].mxu0
        %v459 = vadd.f32 0.0, %v458
        %460 = vmatprep.mubr.bf16.mxu0 0
        %461 = vmatmul.mubr.bf16.gmra.mrb[0].mxu0 %v253
        %v462 = vpop.f32.mrb[0].mxu0
        %v463 = vadd.f32 0.0, %v462
        %v464 = vpop.f32.mrb[0].mxu0
        %v465 = vadd.f32 0.0, %v464
        %v466 = vpop.f32.mrb[0].mxu0
        %v467 = vadd.f32 0.0, %v466
        %v468 = vpop.f32.mrb[0].mxu0
        %v469 = vadd.f32 0.0, %v468
        %470 = vdwg.mxu0
        %v471 = vmul.f32 %v393, 0.5
        %v472 = vmul.f32 %v395, 0.5
        %v473 = vmul.f32 %v397, 0.5
        %v474 = vmul.f32 %v399, 0.5
        %v475 = vmul.f32 %v403, 0.5
        %v476 = vmul.f32 %v405, 0.5
        %v477 = vmul.f32 %v407, 0.5
        %v478 = vmul.f32 %v409, 0.5
        %v479 = vmul.f32 %v413, 0.5
        %v480 = vmul.f32 %v415, 0.5
        %v481 = vmul.f32 %v417, 0.5
        %v482 = vmul.f32 %v419, 0.5
        %v483 = vmul.f32 %v423, 0.5
        %v484 = vmul.f32 %v425, 0.5
        %v485 = vmul.f32 %v427, 0.5
        %v486 = vmul.f32 %v429, 0.5
        %v487 = vmul.f32 %v433, 0.5
        %v488 = vmul.f32 %v435, 0.5
        %v489 = vmul.f32 %v437, 0.5
        %v490 = vmul.f32 %v439, 0.5
        %v491 = vmul.f32 %v443, 0.5
        %v492 = vmul.f32 %v445, 0.5
        %v493 = vmul.f32 %v447, 0.5
        %v494 = vmul.f32 %v449, 0.5
        %v495 = vmul.f32 %v453, 0.5
        %v496 = vmul.f32 %v455, 0.5
        %v497 = vmul.f32 %v457, 0.5
        %v498 = vmul.f32 %v459, 0.5
        %v499 = vmul.f32 %v463, 0.5
        %v500 = vmul.f32 %v465, 0.5
        %v501 = vmul.f32 %v467, 0.5
        %v502 = vmul.f32 %v469, 0.5
        %v503 = vtanh.pop %v471
        %v504 = vtanh.pop %v472
        %v505 = vtanh.pop %v473
        %v506 = vtanh.pop %v474
        %v507 = vtanh.pop %v475
        %v508 = vtanh.pop %v476
        %v509 = vtanh.pop %v477
        %v510 = vtanh.pop %v478
        %v511 = vtanh.pop %v479
        %v512 = vtanh.pop %v480
        %v513 = vtanh.pop %v481
        %v514 = vtanh.pop %v482
        %v515 = vtanh.pop %v483
        %v516 = vtanh.pop %v484
        %v517 = vtanh.pop %v485
        %v518 = vtanh.pop %v486
        %v519 = vtanh.pop %v487
        %v520 = vtanh.pop %v488
        %v521 = vtanh.pop %v489
        %v522 = vtanh.pop %v490
        %v523 = vtanh.pop %v491
        %v524 = vtanh.pop %v492
        %v525 = vtanh.pop %v493
        %v526 = vtanh.pop %v494
        %v527 = vtanh.pop %v495
        %v528 = vtanh.pop %v496
        %v529 = vtanh.pop %v497
        %v530 = vtanh.pop %v498
        %v531 = vtanh.pop %v499
        %v532 = vtanh.pop %v500
        %v533 = vtanh.pop %v501
        %v534 = vtanh.pop %v502
        %v535 = vmul.f32 %v503, 0.5
        %v536 = vmul.f32 %v504, 0.5
        %v537 = vmul.f32 %v505, 0.5
        %v538 = vmul.f32 %v506, 0.5
        %v539 = vmul.f32 %v507, 0.5
        %v540 = vmul.f32 %v508, 0.5
        %v541 = vmul.f32 %v509, 0.5
        %v542 = vmul.f32 %v510, 0.5
        %v543 = vmul.f32 %v511, 0.5
        %v544 = vmul.f32 %v512, 0.5
        %v545 = vmul.f32 %v513, 0.5
        %v546 = vmul.f32 %v514, 0.5
        %v547 = vmul.f32 %v515, 0.5
        %v548 = vmul.f32 %v516, 0.5
        %v549 = vmul.f32 %v517, 0.5
        %v550 = vmul.f32 %v518, 0.5
        %v551 = vmul.f32 %v519, 0.5
        %v552 = vmul.f32 %v520, 0.5
        %v553 = vmul.f32 %v521, 0.5
        %v554 = vmul.f32 %v522, 0.5
        %v555 = vmul.f32 %v523, 0.5
        %v556 = vmul.f32 %v524, 0.5
        %v557 = vmul.f32 %v525, 0.5
        %v558 = vmul.f32 %v526, 0.5
        %v559 = vmul.f32 %v527, 0.5
        %v560 = vmul.f32 %v528, 0.5
        %v561 = vmul.f32 %v529, 0.5
        %v562 = vmul.f32 %v530, 0.5
        %v563 = vmul.f32 %v531, 0.5
        %v564 = vmul.f32 %v532, 0.5
        %v565 = vmul.f32 %v533, 0.5
        %v566 = vmul.f32 %v534, 0.5
        %v567 = vadd.f32 %v535, 0.5
        %v568 = vadd.f32 %v536, 0.5
        %v569 = vadd.f32 %v537, 0.5
        %v570 = vadd.f32 %v538, 0.5
        %v571 = vadd.f32 %v539, 0.5
        %v572 = vadd.f32 %v540, 0.5
        %v573 = vadd.f32 %v541, 0.5
        %v574 = vadd.f32 %v542, 0.5
        %v575 = vadd.f32 %v543, 0.5
        %v576 = vadd.f32 %v544, 0.5
        %v577 = vadd.f32 %v545, 0.5
        %v578 = vadd.f32 %v546, 0.5
        %v579 = vadd.f32 %v547, 0.5
        %v580 = vadd.f32 %v548, 0.5
        %v581 = vadd.f32 %v549, 0.5
        %v582 = vadd.f32 %v550, 0.5
        %v583 = vadd.f32 %v551, 0.5
        %v584 = vadd.f32 %v552, 0.5
        %v585 = vadd.f32 %v553, 0.5
        %v586 = vadd.f32 %v554, 0.5
        %v587 = vadd.f32 %v555, 0.5
        %v588 = vadd.f32 %v556, 0.5
        %v589 = vadd.f32 %v557, 0.5
        %v590 = vadd.f32 %v558, 0.5
        %v591 = vadd.f32 %v559, 0.5
        %v592 = vadd.f32 %v560, 0.5
        %v593 = vadd.f32 %v561, 0.5
        %v594 = vadd.f32 %v562, 0.5
        %v595 = vadd.f32 %v563, 0.5
        %v596 = vadd.f32 %v564, 0.5
        %v597 = vadd.f32 %v565, 0.5
        %v598 = vadd.f32 %v566, 0.5
        %599 = vst [vmem:[%s151] sm:$0xff] %v567
        %600 = vst [vmem:[%s151 + $0x8] sm:$0xff] %v568
        %601 = vst [vmem:[%s151 + $0x10] sm:$0xff] %v569
        %602 = vst [vmem:[%s151 + $0x18] sm:$0xff] %v570
        %603 = vst [vmem:[%s151 + $0x20] sm:$0xff] %v571
        %604 = vst [vmem:[%s151 + $0x28] sm:$0xff] %v572
        %605 = vst [vmem:[%s151 + $0x30] sm:$0xff] %v573
        %606 = vst [vmem:[%s151 + $0x38] sm:$0xff] %v574
        %607 = vst [vmem:[%s151 + $0x40] sm:$0xff] %v575
        %608 = vst [vmem:[%s151 + $0x48] sm:$0xff] %v576
        %609 = vst [vmem:[%s151 + $0x50] sm:$0xff] %v577
        %610 = vst [vmem:[%s151 + $0x58] sm:$0xff] %v578
        %611 = vst [vmem:[%s151 + $0x60] sm:$0xff] %v579
        %612 = vst [vmem:[%s151 + $0x68] sm:$0xff] %v580
        %613 = vst [vmem:[%s151 + $0x70] sm:$0xff] %v581
        %614 = vst [vmem:[%s151 + $0x78] sm:$0xff] %v582
        %615 = vst [vmem:[%s151 + $0x80] sm:$0xff] %v583
        %616 = vst [vmem:[%s151 + $0x88] sm:$0xff] %v584
        %617 = vst [vmem:[%s151 + $0x90] sm:$0xff] %v585
        %618 = vst [vmem:[%s151 + $0x98] sm:$0xff] %v586
        %619 = vst [vmem:[%s151 + $0xa0] sm:$0xff] %v587
        %620 = vst [vmem:[%s151 + $0xa8] sm:$0xff] %v588
        %621 = vst [vmem:[%s151 + $0xb0] sm:$0xff] %v589
        %622 = vst [vmem:[%s151 + $0xb8] sm:$0xff] %v590
        %623 = vst [vmem:[%s151 + $0xc0] sm:$0xff] %v591
        %624 = vst [vmem:[%s151 + $0xc8] sm:$0xff] %v592
        %625 = vst [vmem:[%s151 + $0xd0] sm:$0xff] %v593
        %626 = vst [vmem:[%s151 + $0xd8] sm:$0xff] %v594
        %627 = vst [vmem:[%s151 + $0xe0] sm:$0xff] %v595
        %628 = vst [vmem:[%s151 + $0xe8] sm:$0xff] %v596
        %629 = vst [vmem:[%s151 + $0xf0] sm:$0xff] %v597
        %630 = vst [vmem:[%s151 + $0xf8] sm:$0xff] %v598
        %s631 = sand.u32 %s85, 1
        %s632 = scalar_lea.sflag [#allocation3], %s631
        %s633 = sand.u32 %s85, 1
        %s634 = smul.addr %s633, 256
        %s635 = scalar_lea.vmem [#allocation2], %s634
        // Predicated region
        $region29: #{inner_product_decoder.1} parent=27 // pred_check
          %p636 = pneg %p95
        $region30: #{inner_product_decoder.1} parent=27 // pred_check_branch
          %638 = sbr.rel (%p636) target = $region32
        $region31: #{inner_product_decoder.1} parent=27 // pred_region
          %s639 = smul.u32 16, %s20
          %s640 = smul.u32 2, %s21
          %s642 = ssub.s32 4096, 4096
          %643 = vsyncadd %s632, %s642
          %s644 = smul.addr %s639, 2
          %s645 = sadd.s32 %s640, %s644
          %s646 = smul.addr %s645, 128
          %s647 = scalar_lea.hbm %s2, %s646
          %s648 = sshll.u32 %s635, 4
          %s649 = int_to_ptr.vmem [resolvable:$true] %s648
          %654 = dma.vmem_to_hbm [thread:$0]  %s649, 4096, %s647, %s632, 256, 256, 16
        $region32: #{inner_product_decoder.1} parent=27 // pred_fallthru
          _
      $region28: #{inner_product_decoder.1} parent=5 // pred_fallthru
        _
      %p655 = scmp.le.s32.totalorder 2, %s11
      // Predicated region
      $region33: #{inner_product_decoder.1} parent=5 // pred_check
        %p656 = pneg %p655
      $region34: #{inner_product_decoder.1} parent=5 // pred_check_branch
        %658 = sbr.rel (%p656) target = $region36
      $region35: #{inner_product_decoder.1} parent=5 // pred_region
        %s659 = ssub.s32 %s11, 2
        // Predicated region
        $region37: #{inner_product_decoder.1} parent=35 // pred_check
          %p660 = pneg %p101
        $region38: #{inner_product_decoder.1} parent=35 // pred_check_branch
          %662 = sbr.rel (%p660) target = $region40
        $region39: #{inner_product_decoder.1} parent=35 // pred_region
          %s663 = sand.u32 %s86, 1
          %s664 = scalar_lea.sflag [#allocation3], %s663
          %s665 = sand.u32 %s86, 1
          %s666 = smul.addr %s665, 256
          %s667 = scalar_lea.vmem [#allocation2], %s666
          %668 = dma.done %s664, 4096
        $region40: #{inner_product_decoder.1} parent=35 // pred_fallthru
          _
      $region36: #{inner_product_decoder.1} parent=5 // pred_fallthru
        _
    $region6: #{inner_product_decoder.1} parent=1 // loop_footer
      %s15 = sadd.s32 1, %s11
    $region7: #{inner_product_decoder.1} parent=1 // loop_footer_branch
      %10 = sbr.rel target = $region3
    $region8: #{inner_product_decoder.1} parent=1 // loop_exit
      _
    %669 = vsyncpa [#allocation3], 1
    %s670 = scalar_lea.sflag [#allocation3], 1
    %671 = vsyncpa %s670, 1

</llo_original>
